<compile_context>
chip_gen: v5e
topology: v5e:2x2
jax: 0.10.0
libtpu: 0.0.40
codegen_flags: <defaults>
</compile_context>

<pallas_src>
import jax
import jax.numpy as jnp
from jax.experimental import pallas as pl
from jax.experimental.pallas import tpu as pltpu

LANE = 128          # vreg lane width -> hidden/output lane padding target
SUBLANE_BF16 = 16   # bf16 min tile is (16, 128) -> token-axis / K alignment
TM_MAX = 1024       # token-tile cap (amortizes per-grid-step overhead)


def _round_up(x, m):
    return ((x + m - 1) // m) * m


def _choose_tm(m):
    """Pick the token-axis tile size.

    Large M  -> up to TM_MAX rows per step (mem-bound kernel, big tiles win).
    Mid M    -> aim for >= 2 grid steps so v7x's two TensorCores both work.
    Tiny M   -> a single minimal (16-row) step.
    Remainder padding (dead DMA/compute) is bounded to ~12.5% of M.
    """
    m_al = _round_up(max(m, 1), SUBLANE_BF16)
    if m_al <= 2 * SUBLANE_BF16:
        return m_al
    tm = min(TM_MAX, _round_up((m_al + 1) // 2, SUBLANE_BF16))
    # Shrink tile until remainder padding <= ~12.5% of the real token count.
    while tm > SUBLANE_BF16 and (_round_up(m_al, tm) - m_al) * 8 > m_al:
        tm = _round_up(tm // 2, SUBLANE_BF16)
    return tm


def _make_fused_mlp_kernel(num_layers):
    """Kernel factory: refs are (x, w0, b0, w1, b1, ..., out)."""

    def kernel(x_ref, *rest):
        o_ref = rest[-1]
        wb = rest[:-1]
        h = x_ref[...]                                   # (TM, in_pad), bf16
        for i in range(num_layers):                      # unrolled at trace time
            w_ref = wb[2 * i]
            b_ref = wb[2 * i + 1]
            # MXU matmul: bf16 x bf16 -> f32 accumulator.
            y = jnp.dot(h, w_ref[...], preferred_element_type=jnp.float32)
            y = y + b_ref[...]                           # (1, out_pad) f32 broadcast
            if i < num_layers - 1:
                h = jnp.maximum(y, 0.0).astype(w_ref.dtype)  # ReLU in f32 -> bf16
            else:
                o_ref[...] = y.astype(o_ref.dtype)       # lane-dense store

    return kernel


def _fused_mlp_forward(xp, w_padded, b_padded, tm, out_dtype):
    """xp: (M_pad, in_pad) bf16; w_padded[i]: (K_pad, N_pad) bf16; b: (1, N_pad) f32."""
    m_pad, in_pad = xp.shape
    num_layers = len(w_padded)
    out_pad = w_padded[-1].shape[1]
    out_itemsize = jnp.dtype(out_dtype).itemsize

    in_specs = [pl.BlockSpec((tm, in_pad), lambda i: (i, 0))]
    operands = [xp]
    for w, b in zip(w_padded, b_padded):
        # Full-array blocks, constant index_map -> weights stay VMEM-resident.
        in_specs.append(pl.BlockSpec(w.shape, lambda i: (0, 0)))
        in_specs.append(pl.BlockSpec(b.shape, lambda i: (0, 0)))
        operands.append(w)
        operands.append(b)

    weight_bytes = sum(w.size * w.dtype.itemsize for w in w_padded) + \
                   sum(b.size * b.dtype.itemsize for b in b_padded)
    flops = 2 * m_pad * sum(w.shape[0] * w.shape[1] for w in w_padded)
    bytes_accessed = (m_pad * in_pad * xp.dtype.itemsize        # x read (bf16)
                      + m_pad * out_pad * out_itemsize          # out write
                      + weight_bytes)                           # resident params

    # VMEM budget: resident weights + double-buffered x/out tiles + slack.
    # Explicit because v5e's default scoped VMEM is 16 MiB; capped at 48 MiB
    # which stays inside v7x's 64 MiB/TC physical VMEM.
    io_bytes = 2 * (tm * in_pad * xp.dtype.itemsize + tm * out_pad * out_itemsize)
    vmem_limit = min(48 * 1024 * 1024,
                     max(32 * 1024 * 1024, int(1.5 * (weight_bytes + io_bytes))))

    return pl.pallas_call(
        _make_fused_mlp_kernel(num_layers),
        out_shape=jax.ShapeDtypeStruct((m_pad, out_pad), out_dtype),
        grid=(m_pad // tm,),
        in_specs=in_specs,
        out_specs=pl.BlockSpec((tm, out_pad), lambda i: (i, 0)),
        compiler_params=pltpu.CompilerParams(
            dimension_semantics=("parallel",),          # megacore sharding on v7x
            vmem_limit_bytes=vmem_limit,
        ),
        cost_estimate=pl.CostEstimate(
            flops=flops, transcendentals=0, bytes_accessed=bytes_accessed),
    )(*operands)


class PallasMLP:
    """Mirror of the PyTorch MLP: num_layers Linear layers, ReLU in between."""

    def __init__(self, input_dim, hidden_dim, output_dim, num_layers, key,
                 compute_dtype=jnp.bfloat16, out_dtype=jnp.bfloat16):
        self.num_layers = num_layers
        self.input_dim = input_dim
        self.output_dim = output_dim
        self.compute_dtype = compute_dtype
        self.out_dtype = out_dtype

        h = [hidden_dim] * (num_layers - 1)
        dims_in = [input_dim] + h
        dims_out = h + [output_dim]

        # PyTorch-style parameters (f32, W is (out, in)) -- kept for the reference.
        self.weights = []
        self.biases = []
        for n, k in zip(dims_in, dims_out):
            key, wk, bk = jax.random.split(key, 3)
            bound = 1.0 / jnp.sqrt(jnp.float32(n))
            w = jax.random.uniform(wk, (k, n), jnp.float32, -bound, bound)
            b = jax.random.uniform(bk, (k,), jnp.float32, -bound, bound)
            self.weights.append(w)
            self.biases.append(b)

        # Kernel-ready parameters: transposed to (in, out), zero-padded, cast
        # to bf16 ONCE here.  Input feature dim pads only to 16 (full-array
        # block -> legal, 4x fewer x read bytes when input_dim << 128); hidden
        # and output dims pad to 128 for lane-dense MXU operands and stores.
        self._in_pad = _round_up(input_dim, SUBLANE_BF16)
        self._out_pad = _round_up(output_dim, LANE)
        pad_in = [self._in_pad] + [_round_up(d, LANE) for d in dims_in[1:]]
        pad_out = [_round_up(d, LANE) for d in dims_out]

        self._w_padded = []
        self._b_padded = []
        for (w, b, kp, np_) in zip(self.weights, self.biases, pad_in, pad_out):
            k_out, k_in = w.shape
            wp = jnp.zeros((kp, np_), jnp.float32).at[:k_in, :k_out].set(w.T)
            bp = jnp.zeros((1, np_), jnp.float32).at[0, :k_out].set(b)
            self._w_padded.append(wp.astype(compute_dtype))
            self._b_padded.append(bp)                    # bias / epilogue stay f32

    def __call__(self, x):
        lead = x.shape[:-1]
        # Cast to compute dtype FIRST, then pad once (no extra f32 buffer).
        x2d = x.reshape(-1, x.shape[-1]).astype(self.compute_dtype)
        m = x2d.shape[0]

        tm = _choose_tm(m)
        m_pad = _round_up(m, tm)            # tm is a multiple of 16 -> aligned
        xp = jnp.pad(x2d, ((0, m_pad - m), (0, self._in_pad - self.input_dim)))

        out = _fused_mlp_forward(xp, self._w_padded, self._b_padded, tm,
                                 self.out_dtype)
        out = out[:m, :self.output_dim].astype(jnp.float32)
        return out.reshape(*lead, self.output_dim)


def _reference_mlp(mlp, x):
    """Plain-JAX f32 reference matching the PyTorch forward semantics."""
    x2d = x.reshape(-1, x.shape[-1])
    for i, (w, b) in enumerate(zip(mlp.weights, mlp.biases)):
        y = x2d @ w.T + b
        x2d = jnp.maximum(y, 0.0) if i < mlp.num_layers - 1 else y
    return x2d.reshape(*x.shape[:-1], x2d.shape[-1])


if __name__ == "__main__":
    key = jax.random.PRNGKey(0)
    key, xkey, pkey = jax.random.split(key, 3)

    # Small shapes: batch=2, seq=8 queries, input_dim=32, hidden=32, output=4.
    batch, seq, input_dim, hidden_dim, output_dim, num_layers = 2, 8, 32, 32, 4, 3
    x = jax.random.normal(xkey, (batch, seq, input_dim), jnp.float32)

    mlp = PallasMLP(input_dim, hidden_dim, output_dim, num_layers, pkey)

    out = jax.block_until_ready(mlp(x))

    ref = _reference_mlp(mlp, x)
    assert out.shape == (batch, seq, output_dim), out.shape
    # bf16 MXU matmul (f32 accumulate) + bf16 output writeback vs pure-f32
    # reference -> relaxed tolerance.
    max_err = float(jnp.max(jnp.abs(out - ref)))
    assert jnp.allclose(out, ref, atol=3e-2, rtol=3e-2), \
        f"mismatch vs reference, max_err={max_err}"

    print("KERNEL_OK")
</pallas_src>

<mosaic_0001>
module attributes {stable_mosaic.version = 11 : i64} {
  func.func @kernel(%arg0: i32, %arg1: memref<16x32xbf16, #tpu.memory_space<vmem>>, %arg2: memref<32x128xbf16, #tpu.memory_space<vmem>>, %arg3: memref<1x128xf32, #tpu.memory_space<vmem>>, %arg4: memref<128x128xbf16, #tpu.memory_space<vmem>>, %arg5: memref<1x128xf32, #tpu.memory_space<vmem>>, %arg6: memref<128x128xbf16, #tpu.memory_space<vmem>>, %arg7: memref<1x128xf32, #tpu.memory_space<vmem>>, %arg8: memref<16x128xbf16, #tpu.memory_space<vmem>>) attributes {dimension_semantics = [#tpu.dimension_semantics<parallel>], iteration_bounds = array<i64: 1>, scalar_prefetch = 0 : i64, scratch_operands = 0 : i64, tpu.core_type = #tpu.core_type<tc>, window_params = [{transform_indices = @transform_0, window_bounds = array<i64: 16, 32>}, {pipeline_mode = #tpu.pipeline_mode<synchronous>, transform_indices = @transform_1, window_bounds = array<i64: 32, 128>}, {pipeline_mode = #tpu.pipeline_mode<synchronous>, transform_indices = @transform_2, window_bounds = array<i64: 1, 128>}, {pipeline_mode = #tpu.pipeline_mode<synchronous>, transform_indices = @transform_3, window_bounds = array<i64: 128, 128>}, {pipeline_mode = #tpu.pipeline_mode<synchronous>, transform_indices = @transform_4, window_bounds = array<i64: 1, 128>}, {pipeline_mode = #tpu.pipeline_mode<synchronous>, transform_indices = @transform_5, window_bounds = array<i64: 128, 128>}, {pipeline_mode = #tpu.pipeline_mode<synchronous>, transform_indices = @transform_6, window_bounds = array<i64: 1, 128>}, {transform_indices = @transform_7, window_bounds = array<i64: 16, 128>}]} {
    %c0 = arith.constant 0 : index
    %c0_0 = arith.constant 0 : index
    %0 = vector.load %arg1[%c0, %c0_0] : memref<16x32xbf16, #tpu.memory_space<vmem>>, vector<16x32xbf16>
    %c0_1 = arith.constant 0 : index
    %c0_2 = arith.constant 0 : index
    %1 = vector.load %arg2[%c0_1, %c0_2] : memref<32x128xbf16, #tpu.memory_space<vmem>>, vector<32x128xbf16>
    %cst = arith.constant dense<0.000000e+00> : vector<16x128xf32>
    %2 = tpu.matmul %0, %1, %cst {dimension_numbers = #tpu.dot_dimension_numbers<[1], [0], [0], [1], [0, 0, 1, 1], [], []>} : vector<16x32xbf16>, vector<32x128xbf16>, vector<16x128xf32> -> vector<16x128xf32>
    %c0_3 = arith.constant 0 : index
    %c0_4 = arith.constant 0 : index
    %3 = vector.load %arg3[%c0_3, %c0_4] : memref<1x128xf32, #tpu.memory_space<vmem>>, vector<1x128xf32>
    %4 = vector.broadcast %3 : vector<1x128xf32> to vector<16x128xf32>
    %5 = arith.addf %2, %4 : vector<16x128xf32>
    %cst_5 = arith.constant 0.000000e+00 : f32
    %6 = vector.broadcast %cst_5 : f32 to vector<16x128xf32>
    %7 = arith.maximumf %5, %6 : vector<16x128xf32>
    %8 = arith.truncf %7 : vector<16x128xf32> to vector<16x128xbf16>
    %c0_6 = arith.constant 0 : index
    %c0_7 = arith.constant 0 : index
    %9 = vector.load %arg4[%c0_6, %c0_7] : memref<128x128xbf16, #tpu.memory_space<vmem>>, vector<128x128xbf16>
    %cst_8 = arith.constant dense<0.000000e+00> : vector<16x128xf32>
    %10 = tpu.matmul %8, %9, %cst_8 {dimension_numbers = #tpu.dot_dimension_numbers<[1], [0], [0], [1], [0, 0, 1, 1], [], []>} : vector<16x128xbf16>, vector<128x128xbf16>, vector<16x128xf32> -> vector<16x128xf32>
    %c0_9 = arith.constant 0 : index
    %c0_10 = arith.constant 0 : index
    %11 = vector.load %arg5[%c0_9, %c0_10] : memref<1x128xf32, #tpu.memory_space<vmem>>, vector<1x128xf32>
    %12 = vector.broadcast %11 : vector<1x128xf32> to vector<16x128xf32>
    %13 = arith.addf %10, %12 : vector<16x128xf32>
    %cst_11 = arith.constant 0.000000e+00 : f32
    %14 = vector.broadcast %cst_11 : f32 to vector<16x128xf32>
    %15 = arith.maximumf %13, %14 : vector<16x128xf32>
    %16 = arith.truncf %15 : vector<16x128xf32> to vector<16x128xbf16>
    %c0_12 = arith.constant 0 : index
    %c0_13 = arith.constant 0 : index
    %17 = vector.load %arg6[%c0_12, %c0_13] : memref<128x128xbf16, #tpu.memory_space<vmem>>, vector<128x128xbf16>
    %cst_14 = arith.constant dense<0.000000e+00> : vector<16x128xf32>
    %18 = tpu.matmul %16, %17, %cst_14 {dimension_numbers = #tpu.dot_dimension_numbers<[1], [0], [0], [1], [0, 0, 1, 1], [], []>} : vector<16x128xbf16>, vector<128x128xbf16>, vector<16x128xf32> -> vector<16x128xf32>
    %c0_15 = arith.constant 0 : index
    %c0_16 = arith.constant 0 : index
    %19 = vector.load %arg7[%c0_15, %c0_16] : memref<1x128xf32, #tpu.memory_space<vmem>>, vector<1x128xf32>
    %20 = vector.broadcast %19 : vector<1x128xf32> to vector<16x128xf32>
    %21 = arith.addf %18, %20 : vector<16x128xf32>
    %22 = arith.truncf %21 : vector<16x128xf32> to vector<16x128xbf16>
    %c0_17 = arith.constant 0 : index
    %c0_18 = arith.constant 0 : index
    %23 = vector.load %arg8[%c0_17, %c0_18] : memref<16x128xbf16, #tpu.memory_space<vmem>>, vector<16x128xbf16>
    tpu.vector_store %arg8[%c0_17, %c0_18], %22 {strides = array<i32>} : memref<16x128xbf16, #tpu.memory_space<vmem>>, vector<16x128xbf16>,
    return
  }
  func.func @transform_0(%arg0: i32) -> (i32, i32) {
    %c0_i32 = arith.constant 0 : i32
    %c0_i32_0 = arith.constant 0 : i32
    return %arg0, %c0_i32 : i32, i32
  }
  func.func @transform_1(%arg0: i32) -> (i32, i32) {
    %c0_i32 = arith.constant 0 : i32
    %c0_i32_0 = arith.constant 0 : i32
    %c0_i32_1 = arith.constant 0 : i32
    return %c0_i32, %c0_i32_0 : i32, i32
  }
  func.func @transform_2(%arg0: i32) -> (i32, i32) {
    %c0_i32 = arith.constant 0 : i32
    %c0_i32_0 = arith.constant 0 : i32
    %c0_i32_1 = arith.constant 0 : i32
    return %c0_i32, %c0_i32_0 : i32, i32
  }
  func.func @transform_3(%arg0: i32) -> (i32, i32) {
    %c0_i32 = arith.constant 0 : i32
    %c0_i32_0 = arith.constant 0 : i32
    %c0_i32_1 = arith.constant 0 : i32
    return %c0_i32, %c0_i32_0 : i32, i32
  }
  func.func @transform_4(%arg0: i32) -> (i32, i32) {
    %c0_i32 = arith.constant 0 : i32
    %c0_i32_0 = arith.constant 0 : i32
    %c0_i32_1 = arith.constant 0 : i32
    return %c0_i32, %c0_i32_0 : i32, i32
  }
  func.func @transform_5(%arg0: i32) -> (i32, i32) {
    %c0_i32 = arith.constant 0 : i32
    %c0_i32_0 = arith.constant 0 : i32
    %c0_i32_1 = arith.constant 0 : i32
    return %c0_i32, %c0_i32_0 : i32, i32
  }
  func.func @transform_6(%arg0: i32) -> (i32, i32) {
    %c0_i32 = arith.constant 0 : i32
    %c0_i32_0 = arith.constant 0 : i32
    %c0_i32_1 = arith.constant 0 : i32
    return %c0_i32, %c0_i32_0 : i32, i32
  }
  func.func @transform_7(%arg0: i32) -> (i32, i32) {
    %c0_i32 = arith.constant 0 : i32
    %c0_i32_0 = arith.constant 0 : i32
    return %arg0, %c0_i32 : i32, i32
  }
}

</mosaic_0001>

<llo_original>
// kernel: tpu_custom_call.1
$region0: #{tpu_custom_call.1}
  #allocation0 [shape = 'u32[]', space=smem, size = 0x4, offset = 0x4, fixed_abs, tag = 'smem constant byte address 0x4 - core index']
  #allocation1 [shape = 'u32[72,128]{1,0:T(1,128)}', space=vmem, size = 0x9000, scoped, tag = 'internal scratch']
  %s0 = inlined_call_operand.hbm [shape: bf16[16,32], index: 0, kind: input, shape index: {}]
  %s1 = inlined_call_operand.hbm [shape: bf16[32,128], index: 1, kind: input, shape index: {}]
  %s2 = inlined_call_operand.vmem [shape: f32[1,128], index: 2, kind: input, shape index: {}]
  %s3 = inlined_call_operand.hbm [shape: bf16[128,128], index: 3, kind: input, shape index: {}]
  %s4 = inlined_call_operand.vmem [shape: f32[1,128], index: 4, kind: input, shape index: {}]
  %s5 = inlined_call_operand.hbm [shape: bf16[128,128], index: 5, kind: input, shape index: {}]
  %s6 = inlined_call_operand.vmem [shape: f32[1,128], index: 6, kind: input, shape index: {}]
  %s7 = inlined_call_operand.hbm [shape: bf16[16,128], index: 7, kind: output, shape index: {}]
  %s8 = sld [smem:[#allocation0]]
  $region54: #{tpu_custom_call.1} parent=0
    _
  %s10 = ssub.s32 1, %s8
  %s11 = scalar_select 0, %s10, %s8
  $region1: #{tpu_custom_call.1} parent=0
    #allocation2 [shape = 'u8[4096]{0}', space=vmem, size = 0x1000, scoped, tag = 'input window, operand 0, single buffered']
    #allocation3 [shape = 's32[1]{0}', space=sflag, size = 0x4, scoped, tag = 'scoped memory for tpu_custom_call.1']
    #allocation4 [shape = 's32[1]{0}', space=sflag, size = 0x4, scoped, tag = 'scoped memory for tpu_custom_call.1']
    #allocation5 [shape = 'u8[8192]{0}', space=vmem, size = 0x2000, scoped, tag = 'input window, operand 1, single buffered']
    #allocation6 [shape = 's32[1]{0}', space=sflag, size = 0x4, scoped, tag = 'scoped memory for tpu_custom_call.1']
    #allocation7 [shape = 'u8[32768]{0}', space=vmem, size = 0x8000, scoped, tag = 'input window, operand 3, single buffered']
    #allocation8 [shape = 'u8[32768]{0}', space=vmem, size = 0x8000, scoped, tag = 'input window, operand 5, single buffered']
    #allocation9 [shape = 's32[1]{0}', space=sflag, size = 0x4, scoped, tag = 'scoped memory for tpu_custom_call.1']
    #allocation10 [shape = 'u8[4096]{0}', space=vmem, size = 0x1000, scoped, tag = 'output window, operand 0, single buffered']
    %12 = vsyncpa [#allocation3], 0
    %13 = vsyncpa [#allocation6], 0
    %14 = vsyncpa [#allocation9], 0
    %15 = vsyncpa [#allocation4], 0
    // Predicated region
    $region2: #{tpu_custom_call.1} parent=1 // pred_check
      _
    $region3: #{tpu_custom_call.1} parent=1 // pred_check_branch
      %17 = sbr.rel (0) target = $region5
    $region4: #{tpu_custom_call.1} parent=1 // pred_region
      %19 = vsyncadd [#allocation3], 0
      %s20 = sshll.u32 %s0, 4
      %s21 = int_to_ptr.hbm [resolvable:$true] %s20
      %s22 = sshll.u32 [#allocation2], 4
      %s23 = int_to_ptr.vmem [resolvable:$true] %s22
      %28 = dma.hbm_to_vmem [thread:$0]  %s21, 128, %s23, [#allocation3], 64, 64, 4
    $region5: #{tpu_custom_call.1} parent=1 // pred_fallthru
      _
    // Predicated region
    $region6: #{tpu_custom_call.1} parent=1 // pred_check
      _
    $region7: #{tpu_custom_call.1} parent=1 // pred_check_branch
      %30 = sbr.rel (0) target = $region9
    $region8: #{tpu_custom_call.1} parent=1 // pred_region
      %32 = vsyncadd [#allocation6], 0
      %s33 = sshll.u32 %s1, 4
      %s34 = int_to_ptr.hbm [resolvable:$true] %s33
      %s35 = sshll.u32 [#allocation5], 4
      %s36 = int_to_ptr.vmem [resolvable:$true] %s35
      %41 = dma.hbm_to_vmem [thread:$0]  %s34, 256, %s36, [#allocation6], 64, 64, 4
    $region9: #{tpu_custom_call.1} parent=1 // pred_fallthru
      _
    // Predicated region
    $region10: #{tpu_custom_call.1} parent=1 // pred_check
      _
    $region11: #{tpu_custom_call.1} parent=1 // pred_check_branch
      %43 = sbr.rel (0) target = $region13
    $region12: #{tpu_custom_call.1} parent=1 // pred_region
      _
    $region13: #{tpu_custom_call.1} parent=1 // pred_fallthru
      _
    // Predicated region
    $region14: #{tpu_custom_call.1} parent=1 // pred_check
      _
    $region15: #{tpu_custom_call.1} parent=1 // pred_check_branch
      %45 = sbr.rel (0) target = $region17
    $region16: #{tpu_custom_call.1} parent=1 // pred_region
      %47 = vsyncadd [#allocation6], 0
      %s48 = sshll.u32 %s3, 4
      %s49 = int_to_ptr.hbm [resolvable:$true] %s48
      %s50 = sshll.u32 [#allocation7], 4
      %s51 = int_to_ptr.vmem [resolvable:$true] %s50
      %56 = dma.hbm_to_vmem [thread:$0]  %s49, 1024, %s51, [#allocation6], 64, 64, 4
    $region17: #{tpu_custom_call.1} parent=1 // pred_fallthru
      _
    // Predicated region
    $region18: #{tpu_custom_call.1} parent=1 // pred_check
      _
    $region19: #{tpu_custom_call.1} parent=1 // pred_check_branch
      %58 = sbr.rel (0) target = $region21
    $region20: #{tpu_custom_call.1} parent=1 // pred_region
      _
    $region21: #{tpu_custom_call.1} parent=1 // pred_fallthru
      _
    // Predicated region
    $region22: #{tpu_custom_call.1} parent=1 // pred_check
      _
    $region23: #{tpu_custom_call.1} parent=1 // pred_check_branch
      %60 = sbr.rel (0) target = $region25
    $region24: #{tpu_custom_call.1} parent=1 // pred_region
      %62 = vsyncadd [#allocation9], 0
      %s63 = sshll.u32 %s5, 4
      %s64 = int_to_ptr.hbm [resolvable:$true] %s63
      %s65 = sshll.u32 [#allocation8], 4
      %s66 = int_to_ptr.vmem [resolvable:$true] %s65
      %71 = dma.hbm_to_vmem [thread:$0]  %s64, 1024, %s66, [#allocation9], 64, 64, 4
    $region25: #{tpu_custom_call.1} parent=1 // pred_fallthru
      _
    // Predicated region
    $region26: #{tpu_custom_call.1} parent=1 // pred_check
      _
    $region27: #{tpu_custom_call.1} parent=1 // pred_check_branch
      %73 = sbr.rel (0) target = $region29
    $region28: #{tpu_custom_call.1} parent=1 // pred_region
      _
    $region29: #{tpu_custom_call.1} parent=1 // pred_fallthru
      _
    // Predicated region
    $region30: #{tpu_custom_call.1} parent=1 // pred_check
      _
    $region31: #{tpu_custom_call.1} parent=1 // pred_check_branch
      %75 = sbr.rel (0) target = $region33
    $region32: #{tpu_custom_call.1} parent=1 // pred_region
      %77 = dma.done [#allocation3], 128
    $region33: #{tpu_custom_call.1} parent=1 // pred_fallthru
      _
    // Predicated region
    $region34: #{tpu_custom_call.1} parent=1 // pred_check
      _
    $region35: #{tpu_custom_call.1} parent=1 // pred_check_branch
      %79 = sbr.rel (0) target = $region37
    $region36: #{tpu_custom_call.1} parent=1 // pred_region
      %81 = dma.done [#allocation6], 256
    $region37: #{tpu_custom_call.1} parent=1 // pred_fallthru
      _
    // Predicated region
    $region38: #{tpu_custom_call.1} parent=1 // pred_check
      _
    $region39: #{tpu_custom_call.1} parent=1 // pred_check_branch
      %83 = sbr.rel (0) target = $region41
    $region40: #{tpu_custom_call.1} parent=1 // pred_region
      %85 = dma.done [#allocation6], 1024
    $region41: #{tpu_custom_call.1} parent=1 // pred_fallthru
      _
    // Predicated region
    $region42: #{tpu_custom_call.1} parent=1 // pred_check
      _
    $region43: #{tpu_custom_call.1} parent=1 // pred_check_branch
      %87 = sbr.rel (0) target = $region45
    $region44: #{tpu_custom_call.1} parent=1 // pred_region
      %89 = dma.done [#allocation9], 1024
    $region45: #{tpu_custom_call.1} parent=1 // pred_fallthru
      _
    %v91 = vld [vmem:[#allocation2] sm:$0xf]
    %v92 = vld [vmem:[#allocation2 + $0x4] sm:$0xf]
    %v93 = vld [vmem:[#allocation5] sm:$0xf]
    %v94 = vld [vmem:[#allocation5 + $0x4] sm:$0xf]
    %v95 = vld [vmem:[#allocation5 + $0x8] sm:$0xf]
    %v96 = vld [vmem:[#allocation5 + $0xc] sm:$0xf]
    %v97 = vld [vmem:[%s2] sm:$0x1]
    %v99 = vperm.slane %v97, 0
    %v103 = vunpack.c.l.b16 %v91
    %v104 = vunpack.c.l.b16 %v92
    %v105 = vpack.c.b16 %v104, %v103
    %v110 = vunpack.c.l.b16 %v93
    %v111 = vunpack.c.l.b16 %v94
    %v112 = vunpack.c.l.b16 %v95
    %v113 = vunpack.c.l.b16 %v96
    %v114 = vpack.c.b16 %v111, %v110
    %v115 = vpack.c.b16 %v113, %v112
    %vm118 = vcmask 261120
    %v120 = vsel %vm118, %v105, 0
    %122 = vmatpush.bf16.msra.mxu0 0
    %123 = vmatpush.bf16.msra.mxu0 0
    %124 = vmatpush.bf16.msra.mxu0 0
    %125 = vmatpush.bf16.msra.mxu0 0
    %126 = vmatpush.bf16.msra.mxu0 0
    %127 = vmatpush.bf16.msra.mxu0 0
    %128 = vmatpush.bf16.msra.mxu0 %v115
    %129 = vmatpush.bf16.msra.mxu0 %v114
    %130 = vmatmul.bf16.gmra.mxu0 %v120
    %v131 = vpop.f32.mrf.mxu0
    %v132 = vadd.f32 %v99, %v131
    %v133 = vpop.f32.mrf.mxu0
    %v134 = vadd.f32 %v99, %v133
    %135 = vdwg.mxu0
    %v136 = vmax.f32 %v132, 0.0
    %v137 = vmax.f32 %v134, 0.0
    %v138 = vpack.c.bf16 %v137, %v136
    %v139 = vld [vmem:[#allocation7] sm:$0xf]
    %v140 = vld [vmem:[#allocation7 + $0x4] sm:$0xf]
    %v141 = vld [vmem:[#allocation7 + $0x8] sm:$0xf]
    %v142 = vld [vmem:[#allocation7 + $0xc] sm:$0xf]
    %v143 = vld [vmem:[#allocation7 + $0x10] sm:$0xf]
    %v144 = vld [vmem:[#allocation7 + $0x14] sm:$0xf]
    %v145 = vld [vmem:[#allocation7 + $0x18] sm:$0xf]
    %v146 = vld [vmem:[#allocation7 + $0x1c] sm:$0xf]
    %v147 = vld [vmem:[#allocation7 + $0x20] sm:$0xf]
    %v148 = vld [vmem:[#allocation7 + $0x24] sm:$0xf]
    %v149 = vld [vmem:[#allocation7 + $0x28] sm:$0xf]
    %v150 = vld [vmem:[#allocation7 + $0x2c] sm:$0xf]
    %v151 = vld [vmem:[#allocation7 + $0x30] sm:$0xf]
    %v152 = vld [vmem:[#allocation7 + $0x34] sm:$0xf]
    %v153 = vld [vmem:[#allocation7 + $0x38] sm:$0xf]
    %v154 = vld [vmem:[#allocation7 + $0x3c] sm:$0xf]
    %v155 = vld [vmem:[%s4] sm:$0x1]
    %v157 = vperm.slane %v155, 0
    %v175 = vunpack.c.l.b16 %v139
    %v176 = vunpack.c.l.b16 %v140
    %v177 = vunpack.c.l.b16 %v141
    %v178 = vunpack.c.l.b16 %v142
    %v179 = vunpack.c.l.b16 %v143
    %v180 = vunpack.c.l.b16 %v144
    %v181 = vunpack.c.l.b16 %v145
    %v182 = vunpack.c.l.b16 %v146
    %v183 = vunpack.c.l.b16 %v147
    %v184 = vunpack.c.l.b16 %v148
    %v185 = vunpack.c.l.b16 %v149
    %v186 = vunpack.c.l.b16 %v150
    %v187 = vunpack.c.l.b16 %v151
    %v188 = vunpack.c.l.b16 %v152
    %v189 = vunpack.c.l.b16 %v153
    %v190 = vunpack.c.l.b16 %v154
    %v191 = vpack.c.b16 %v176, %v175
    %v192 = vpack.c.b16 %v178, %v177
    %v193 = vpack.c.b16 %v180, %v179
    %v194 = vpack.c.b16 %v182, %v181
    %v195 = vpack.c.b16 %v184, %v183
    %v196 = vpack.c.b16 %v186, %v185
    %v197 = vpack.c.b16 %v188, %v187
    %v198 = vpack.c.b16 %v190, %v189
    %207 = vmatpush.bf16.msra.mxu0 %v198
    %208 = vmatpush.bf16.msra.mxu0 %v197
    %209 = vmatpush.bf16.msra.mxu0 %v196
    %210 = vmatpush.bf16.msra.mxu0 %v195
    %211 = vmatpush.bf16.msra.mxu0 %v194
    %212 = vmatpush.bf16.msra.mxu0 %v193
    %213 = vmatpush.bf16.msra.mxu0 %v192
    %214 = vmatpush.bf16.msra.mxu0 %v191
    %215 = vmatmul.bf16.gmra.mxu0 %v138
    %v216 = vpop.f32.mrf.mxu0
    %v217 = vadd.f32 %v157, %v216
    %v218 = vpop.f32.mrf.mxu0
    %v219 = vadd.f32 %v157, %v218
    %220 = vdwg.mxu0
    %v221 = vmax.f32 %v217, 0.0
    %v222 = vmax.f32 %v219, 0.0
    %v223 = vpack.c.bf16 %v222, %v221
    %v224 = vld [vmem:[#allocation8] sm:$0xf]
    %v225 = vld [vmem:[#allocation8 + $0x4] sm:$0xf]
    %v226 = vld [vmem:[#allocation8 + $0x8] sm:$0xf]
    %v227 = vld [vmem:[#allocation8 + $0xc] sm:$0xf]
    %v228 = vld [vmem:[#allocation8 + $0x10] sm:$0xf]
    %v229 = vld [vmem:[#allocation8 + $0x14] sm:$0xf]
    %v230 = vld [vmem:[#allocation8 + $0x18] sm:$0xf]
    %v231 = vld [vmem:[#allocation8 + $0x1c] sm:$0xf]
    %v232 = vld [vmem:[#allocation8 + $0x20] sm:$0xf]
    %v233 = vld [vmem:[#allocation8 + $0x24] sm:$0xf]
    %v234 = vld [vmem:[#allocation8 + $0x28] sm:$0xf]
    %v235 = vld [vmem:[#allocation8 + $0x2c] sm:$0xf]
    %v236 = vld [vmem:[#allocation8 + $0x30] sm:$0xf]
    %v237 = vld [vmem:[#allocation8 + $0x34] sm:$0xf]
    %v238 = vld [vmem:[#allocation8 + $0x38] sm:$0xf]
    %v239 = vld [vmem:[#allocation8 + $0x3c] sm:$0xf]
    %v240 = vld [vmem:[%s6] sm:$0x1]
    %v242 = vperm.slane %v240, 0
    %v260 = vunpack.c.l.b16 %v224
    %v261 = vunpack.c.l.b16 %v225
    %v262 = vunpack.c.l.b16 %v226
    %v263 = vunpack.c.l.b16 %v227
    %v264 = vunpack.c.l.b16 %v228
    %v265 = vunpack.c.l.b16 %v229
    %v266 = vunpack.c.l.b16 %v230
    %v267 = vunpack.c.l.b16 %v231
    %v268 = vunpack.c.l.b16 %v232
    %v269 = vunpack.c.l.b16 %v233
    %v270 = vunpack.c.l.b16 %v234
    %v271 = vunpack.c.l.b16 %v235
    %v272 = vunpack.c.l.b16 %v236
    %v273 = vunpack.c.l.b16 %v237
    %v274 = vunpack.c.l.b16 %v238
    %v275 = vunpack.c.l.b16 %v239
    %v276 = vpack.c.b16 %v261, %v260
    %v277 = vpack.c.b16 %v263, %v262
    %v278 = vpack.c.b16 %v265, %v264
    %v279 = vpack.c.b16 %v267, %v266
    %v280 = vpack.c.b16 %v269, %v268
    %v281 = vpack.c.b16 %v271, %v270
    %v282 = vpack.c.b16 %v273, %v272
    %v283 = vpack.c.b16 %v275, %v274
    %292 = vmatpush.bf16.msra.mxu0 %v283
    %293 = vmatpush.bf16.msra.mxu0 %v282
    %294 = vmatpush.bf16.msra.mxu0 %v281
    %295 = vmatpush.bf16.msra.mxu0 %v280
    %296 = vmatpush.bf16.msra.mxu0 %v279
    %297 = vmatpush.bf16.msra.mxu0 %v278
    %298 = vmatpush.bf16.msra.mxu0 %v277
    %299 = vmatpush.bf16.msra.mxu0 %v276
    %300 = vmatmul.bf16.gmra.mxu0 %v223
    %v301 = vpop.f32.mrf.mxu0
    %v302 = vadd.f32 %v242, %v301
    %v303 = vpop.f32.mrf.mxu0
    %v304 = vadd.f32 %v242, %v303
    %305 = vdwg.mxu0
    %v306 = vpack.c.bf16 %v302, %v302
    %v307 = vpack.c.bf16 %v304, %v304
    %308 = vst [vmem:[#allocation10] sm:$0xf] %v306
    %309 = vst [vmem:[#allocation10 + $0x4] sm:$0xf] %v307
    // Predicated region
    $region46: #{tpu_custom_call.1} parent=1 // pred_check
      _
    $region47: #{tpu_custom_call.1} parent=1 // pred_check_branch
      %311 = sbr.rel (0) target = $region49
    $region48: #{tpu_custom_call.1} parent=1 // pred_region
      %313 = vsyncadd [#allocation4], 0
      %s314 = sshll.u32 [#allocation10], 4
      %s315 = int_to_ptr.vmem [resolvable:$true] %s314
      %s316 = sshll.u32 %s7, 4
      %s317 = int_to_ptr.hbm [resolvable:$true] %s316
      %322 = dma.vmem_to_hbm [thread:$0]  %s315, 128, %s317, [#allocation4], 64, 64, 4
    $region49: #{tpu_custom_call.1} parent=1 // pred_fallthru
      _
    // Predicated region
    $region50: #{tpu_custom_call.1} parent=1 // pred_check
      _
    $region51: #{tpu_custom_call.1} parent=1 // pred_check_branch
      %324 = sbr.rel (0) target = $region53
    $region52: #{tpu_custom_call.1} parent=1 // pred_region
      %326 = dma.done [#allocation4], 128
    $region53: #{tpu_custom_call.1} parent=1 // pred_fallthru
      _
    %327 = vsyncpa [#allocation3], 1
    %328 = vsyncpa [#allocation6], 1
    %329 = vsyncpa [#allocation9], 1
    %330 = vsyncpa [#allocation4], 1

</llo_original>
